<compile_context>
chip_gen: v6e
topology: v6e:2x2x1
jax: 0.10.0
libtpu: 0.0.40
codegen_flags: <defaults>
</compile_context>

<pallas_src>
import jax
import jax.numpy as jnp
from jax.experimental import pallas as pl
from jax.experimental.pallas import tpu as pltpu

# Small hyperparameters consistent with CNN.__init__/forward.
VOCAB_SIZE = 16
PADDING_IDX = 0
EMB_SIZE = 64        # emb_size (default 300, scaled down)
OUT_CHANNELS = 32    # out_channels (default 100, scaled down)
OUTPUT_SIZE = 4
KERNEL_H = 3
PADDING = 1
BATCH = 2
SEQ = 8

# Lane-dense padded dims (multiples of 128).
VPAD = 128           # vocab padded
EPAD = 128           # emb padded
CPAD = 128           # channels padded
OPAD = 128           # output padded

assert SEQ > 0 and (SEQ & (SEQ - 1)) == 0, "SEQ must be a power of two (for the in-kernel row%SEQ via bitwise AND)"


def _shift_rows(x, d):
    """y[r] = x[r + d] for 0 <= r + d < x.shape[0], else 0.  d is static."""
    n, c = x.shape
    if d == 0:
        return x
    zeros = jnp.zeros((abs(d), c), x.dtype)
    if d > 0:
        return jnp.concatenate([x[d:, :], zeros], axis=0)
    return jnp.concatenate([zeros, x[:n + d, :]], axis=0)


def cnn_kernel(tok_ref, emb_ref, cw_ref, cb_ref, fw_ref, fb_ref, o_ref):
    """tok_ref: (B*S, 1) int32 VMEM.   emb_ref: (VPAD, EPAD) bf16 VMEM.
    cw_ref: (EPAD, KH*CPAD) bf16.  cb_ref: (1, CPAD) f32.
    fw_ref: (CPAD, OPAD) f32.      fb_ref: (1, OPAD) f32.
    o_ref:  (B, OPAD) f32."""
    bs = BATCH * SEQ

    # ---- Embedding gather as ONE one-hot MXU matmul (no scalar gathers) ----
    tok = tok_ref[...]                                          # (BS, 1) int32
    vid = jax.lax.broadcasted_iota(jnp.int32, (bs, VPAD), 1)
    onehot = jnp.where(vid == tok, 1.0, 0.0).astype(jnp.bfloat16)
    rows = jnp.dot(onehot, emb_ref[...],
                   preferred_element_type=jnp.float32)          # (BS, EPAD) f32
    rows_bf = rows.astype(jnp.bfloat16)    # exact: values are bf16 table rows

    # ---- Conv2d(1, C, (KH, E), pad=(1,0)) as ONE MXU push over all taps ----
    # proj[:, k*CPAD:(k+1)*CPAD] = rows @ W_k
    proj = jnp.dot(rows_bf, cw_ref[...],
                   preferred_element_type=jnp.float32)          # (BS, KH*CPAD)

    # Tap k contributes W_k^T emb[b, s + k - PAD]; shift each per-tap
    # projection along the row (sublane) axis and zero the rows where the tap
    # lands in the conv zero padding or would bleed across a batch boundary.
    row = jax.lax.broadcasted_iota(jnp.int32, (bs, 1), 0)
    s_idx = jnp.bitwise_and(row, SEQ - 1)                       # row % SEQ
    conv = jnp.zeros((bs, CPAD), jnp.float32)
    for k in range(KERNEL_H):                                   # static unroll
        d = k - PADDING
        chunk = proj[:, k * CPAD:(k + 1) * CPAD]                # (BS, CPAD)
        shifted = _shift_rows(chunk, d)
        p = s_idx + d
        valid = jnp.logical_and(p >= 0, p < SEQ)                # (BS, 1)
        conv = conv + jnp.where(valid, shifted, 0.0)
    act = jnp.maximum(conv + cb_ref[...], 0.0)                  # bias + ReLU (f32)

    # ---- max_pool1d over the sequence: one XLU reduce ----
    pooled = act.reshape(BATCH, SEQ, CPAD).max(axis=1)          # (B, CPAD)

    # TODO(synk): Dropout(p=0.3) treated as identity (eval-mode semantics).

    # ---- Linear(C, O); kept f32 (trivially small at these shapes) ----
    out = jnp.dot(pooled, fw_ref[...],
                  preferred_element_type=jnp.float32) + fb_ref[...]
    o_ref[...] = out.astype(o_ref.dtype)                        # (B, OPAD), lane-dense


def prepare_params(emb_table, conv_w, conv_b, fc_w, fc_b):
    """One-time parameter prep (pad to lane-dense 128 shapes, bf16-cast the
    heavy MXU operands), hoisted out of the per-call path.
    conv_w (C,1,KH,E) -> (EPAD, KH*CPAD) so the conv is a single MXU matmul."""
    emb_p = jnp.zeros((VPAD, EPAD), jnp.float32)
    emb_p = emb_p.at[:VOCAB_SIZE, :EMB_SIZE].set(emb_table)
    emb_bf = emb_p.astype(jnp.bfloat16)                         # (VPAD, EPAD)

    w_khec = jnp.transpose(conv_w[:, 0, :, :], (1, 2, 0))       # (KH, E, C)
    w_pad = jnp.zeros((KERNEL_H, EPAD, CPAD), jnp.float32)
    w_pad = w_pad.at[:, :EMB_SIZE, :OUT_CHANNELS].set(w_khec)
    cw_all = jnp.transpose(w_pad, (1, 0, 2)).reshape(
        EPAD, KERNEL_H * CPAD).astype(jnp.bfloat16)             # (EPAD, KH*CPAD)

    cb = jnp.zeros((1, CPAD), jnp.float32).at[0, :OUT_CHANNELS].set(conv_b)
    fw = jnp.zeros((CPAD, OPAD), jnp.float32).at[
        :OUT_CHANNELS, :OUTPUT_SIZE].set(fc_w.T)
    fb = jnp.zeros((1, OPAD), jnp.float32).at[0, :OUTPUT_SIZE].set(fc_b)
    return emb_bf, cw_all, cb, fw, fb


@jax.jit
def cnn_forward(x_tokens, emb_bf, cw_all, cb, fw, fb):
    tokens = x_tokens.reshape(BATCH * SEQ, 1).astype(jnp.int32)
    out_pad = pl.pallas_call(
        cnn_kernel,
        out_shape=jax.ShapeDtypeStruct((BATCH, OPAD), jnp.float32),
        in_specs=[
            pl.BlockSpec(memory_space=pltpu.MemorySpace.VMEM),  # token ids (BS,1) i32
            pl.BlockSpec(memory_space=pltpu.MemorySpace.VMEM),  # emb table bf16
            pl.BlockSpec(memory_space=pltpu.MemorySpace.VMEM),  # conv w bf16 (EPAD, KH*CPAD)
            pl.BlockSpec(memory_space=pltpu.MemorySpace.VMEM),  # conv b f32 (1, CPAD)
            pl.BlockSpec(memory_space=pltpu.MemorySpace.VMEM),  # fc w f32 (CPAD, OPAD)
            pl.BlockSpec(memory_space=pltpu.MemorySpace.VMEM),  # fc b f32 (1, OPAD)
        ],
        out_specs=pl.BlockSpec(memory_space=pltpu.MemorySpace.VMEM),
    )(tokens, emb_bf, cw_all, cb, fw, fb)
    return out_pad[:, :OUTPUT_SIZE]                             # slice padded lanes off


if __name__ == "__main__":
    key = jax.random.PRNGKey(0)
    k_emb, k_cw, k_cb, k_fw, k_fb, k_x = jax.random.split(key, 6)

    # Deterministic synthetic parameters (shapes implied by CNN.__init__).
    emb_table = jax.random.normal(k_emb, (VOCAB_SIZE, EMB_SIZE), jnp.float32)
    emb_table = emb_table.at[PADDING_IDX].set(0.0)              # padding_idx row = 0
    conv_w = 0.1 * jax.random.normal(
        k_cw, (OUT_CHANNELS, 1, KERNEL_H, EMB_SIZE), jnp.float32)
    conv_b = 0.1 * jax.random.normal(k_cb, (OUT_CHANNELS,), jnp.float32)
    fc_w = 0.1 * jax.random.normal(k_fw, (OUTPUT_SIZE, OUT_CHANNELS), jnp.float32)
    fc_b = 0.1 * jax.random.normal(k_fb, (OUTPUT_SIZE,), jnp.float32)

    x = jax.random.randint(k_x, (BATCH, SEQ), 0, VOCAB_SIZE)

    params = prepare_params(emb_table, conv_w, conv_b, fc_w, fc_b)
    out = cnn_forward(x, *params)
    jax.block_until_ready(out)
    assert out.shape == (BATCH, OUTPUT_SIZE)

    # Pure-JAX reference.  The embedding table and conv weights are rounded to
    # bf16 exactly as the kernel's MXU operands are; everything else stays f32,
    # so the only difference is f32 accumulation order (~1e-6).
    hi = jax.lax.Precision.HIGHEST
    emb_bf32 = emb_table.astype(jnp.bfloat16).astype(jnp.float32)
    cw_khec = jnp.transpose(conv_w[:, 0, :, :], (1, 2, 0)).astype(
        jnp.bfloat16).astype(jnp.float32)                        # (KH, E, C)
    emb = emb_bf32[x]                                            # (B, S, E)
    embp = jnp.pad(emb, ((0, 0), (PADDING, PADDING), (0, 0)))
    ref_conv = sum(
        jnp.einsum('bse,ec->bsc', embp[:, k:k + SEQ, :], cw_khec[k], precision=hi)
        for k in range(KERNEL_H)) + conv_b
    ref_pool = jnp.max(jnp.maximum(ref_conv, 0.0), axis=1)       # (B, C)
    ref_out = jnp.dot(ref_pool, fc_w.T, precision=hi) + fc_b
    assert jnp.allclose(out, ref_out, atol=2e-3, rtol=2e-3), (out, ref_out)

    print("KERNEL_OK")
</pallas_src>

<mosaic_0001>
module attributes {stable_mosaic.version = 11 : i64} {
  func.func @cnn_kernel(%arg0: memref<16x1xi32, #tpu.memory_space<vmem>>, %arg1: memref<128x128xbf16, #tpu.memory_space<vmem>>, %arg2: memref<128x384xbf16, #tpu.memory_space<vmem>>, %arg3: memref<1x128xf32, #tpu.memory_space<vmem>>, %arg4: memref<128x128xf32, #tpu.memory_space<vmem>>, %arg5: memref<1x128xf32, #tpu.memory_space<vmem>>, %arg6: memref<2x128xf32, #tpu.memory_space<vmem>>) attributes {dimension_semantics = [], scalar_prefetch = 0 : i64, scratch_operands = 0 : i64, tpu.core_type = #tpu.core_type<tc>} {
    %c0 = arith.constant 0 : index
    %c0_0 = arith.constant 0 : index
    %0 = vector.load %arg0[%c0, %c0_0] : memref<16x1xi32, #tpu.memory_space<vmem>>, vector<16x1xi32>
    %1 = tpu.iota {dimensions = array<i32: 1>} : vector<16x128xi32>
    %2 = vector.broadcast %0 : vector<16x1xi32> to vector<16x128xi32>
    %3 = arith.cmpi eq, %1, %2 : vector<16x128xi32>
    %cst = arith.constant 1.000000e+00 : f32
    %cst_1 = arith.constant 0.000000e+00 : f32
    %4 = vector.broadcast %cst : f32 to vector<16x128xf32>
    %5 = vector.broadcast %cst_1 : f32 to vector<16x128xf32>
    %6 = arith.select %3, %4, %5 : vector<16x128xi1>, vector<16x128xf32>
    %7 = arith.truncf %6 : vector<16x128xf32> to vector<16x128xbf16>
    %c0_2 = arith.constant 0 : index
    %c0_3 = arith.constant 0 : index
    %8 = vector.load %arg1[%c0_2, %c0_3] : memref<128x128xbf16, #tpu.memory_space<vmem>>, vector<128x128xbf16>
    %cst_4 = arith.constant dense<0.000000e+00> : vector<16x128xf32>
    %9 = tpu.matmul %7, %8, %cst_4 {dimension_numbers = #tpu.dot_dimension_numbers<[1], [0], [0], [1], [0, 0, 1, 1], [], []>} : vector<16x128xbf16>, vector<128x128xbf16>, vector<16x128xf32> -> vector<16x128xf32>
    %10 = arith.truncf %9 : vector<16x128xf32> to vector<16x128xbf16>
    %c0_5 = arith.constant 0 : index
    %c0_6 = arith.constant 0 : index
    %11 = vector.load %arg2[%c0_5, %c0_6] : memref<128x384xbf16, #tpu.memory_space<vmem>>, vector<128x384xbf16>
    %cst_7 = arith.constant dense<0.000000e+00> : vector<16x384xf32>
    %12 = tpu.matmul %10, %11, %cst_7 {dimension_numbers = #tpu.dot_dimension_numbers<[1], [0], [0], [1], [0, 0, 1, 1], [], []>} : vector<16x128xbf16>, vector<128x384xbf16>, vector<16x384xf32> -> vector<16x384xf32>
    %13 = tpu.iota {dimensions = array<i32: 0>} : vector<16x1xi32>
    %c7_i32 = arith.constant 7 : i32
    %14 = vector.broadcast %c7_i32 : i32 to vector<16x1xi32>
    %15 = arith.andi %13, %14 : vector<16x1xi32>
    %cst_8 = arith.constant 0.000000e+00 : f32
    %16 = vector.broadcast %cst_8 : f32 to vector<16x128xf32>
    %17 = vector.extract_strided_slice %12 {offsets = [0, 0], sizes = [16, 128], strides = [1, 1]} : vector<16x384xf32> to vector<16x128xf32>
    %cst_9 = arith.constant 0.000000e+00 : f32
    %18 = vector.broadcast %cst_9 : f32 to vector<1x128xf32>
    %19 = vector.extract_strided_slice %17 {offsets = [0, 0], sizes = [15, 128], strides = [1, 1]} : vector<16x128xf32> to vector<15x128xf32>
    %20 = tpu.concatenate %18, %19 in 0 : vector<1x128xf32>, vector<15x128xf32> -> vector<16x128xf32>
    %c-1_i32 = arith.constant -1 : i32
    %21 = vector.broadcast %c-1_i32 : i32 to vector<16x1xi32>
    %22 = arith.addi %15, %21 : vector<16x1xi32>
    %c0_i32 = arith.constant 0 : i32
    %23 = vector.broadcast %c0_i32 : i32 to vector<16x1xi32>
    %24 = arith.cmpi sge, %22, %23 : vector<16x1xi32>
    %c8_i32 = arith.constant 8 : i32
    %25 = vector.broadcast %c8_i32 : i32 to vector<16x1xi32>
    %26 = arith.cmpi slt, %22, %25 : vector<16x1xi32>
    %27 = arith.andi %24, %26 : vector<16x1xi1>
    %cst_10 = arith.constant 0.000000e+00 : f32
    %28 = vector.shape_cast %27 : vector<16x1xi1> to vector<16x1xi1>
    %29 = vector.broadcast %28 : vector<16x1xi1> to vector<16x128xi1>
    %30 = vector.broadcast %cst_10 : f32 to vector<16x128xf32>
    %31 = arith.select %29, %20, %30 : vector<16x128xi1>, vector<16x128xf32>
    %32 = arith.addf %16, %31 : vector<16x128xf32>
    %33 = vector.extract_strided_slice %12 {offsets = [0, 128], sizes = [16, 128], strides = [1, 1]} : vector<16x384xf32> to vector<16x128xf32>
    %c0_i32_11 = arith.constant 0 : i32
    %34 = vector.broadcast %c0_i32_11 : i32 to vector<16x1xi32>
    %35 = arith.addi %15, %34 : vector<16x1xi32>
    %c0_i32_12 = arith.constant 0 : i32
    %36 = vector.broadcast %c0_i32_12 : i32 to vector<16x1xi32>
    %37 = arith.cmpi sge, %35, %36 : vector<16x1xi32>
    %c8_i32_13 = arith.constant 8 : i32
    %38 = vector.broadcast %c8_i32_13 : i32 to vector<16x1xi32>
    %39 = arith.cmpi slt, %35, %38 : vector<16x1xi32>
    %40 = arith.andi %37, %39 : vector<16x1xi1>
    %cst_14 = arith.constant 0.000000e+00 : f32
    %41 = vector.shape_cast %40 : vector<16x1xi1> to vector<16x1xi1>
    %42 = vector.broadcast %41 : vector<16x1xi1> to vector<16x128xi1>
    %43 = vector.broadcast %cst_14 : f32 to vector<16x128xf32>
    %44 = arith.select %42, %33, %43 : vector<16x128xi1>, vector<16x128xf32>
    %45 = arith.addf %32, %44 : vector<16x128xf32>
    %46 = vector.extract_strided_slice %12 {offsets = [0, 256], sizes = [16, 128], strides = [1, 1]} : vector<16x384xf32> to vector<16x128xf32>
    %cst_15 = arith.constant 0.000000e+00 : f32
    %47 = vector.broadcast %cst_15 : f32 to vector<1x128xf32>
    %48 = vector.extract_strided_slice %46 {offsets = [1, 0], sizes = [15, 128], strides = [1, 1]} : vector<16x128xf32> to vector<15x128xf32>
    %49 = tpu.concatenate %48, %47 in 0 : vector<15x128xf32>, vector<1x128xf32> -> vector<16x128xf32>
    %c1_i32 = arith.constant 1 : i32
    %50 = vector.broadcast %c1_i32 : i32 to vector<16x1xi32>
    %51 = arith.addi %15, %50 : vector<16x1xi32>
    %c0_i32_16 = arith.constant 0 : i32
    %52 = vector.broadcast %c0_i32_16 : i32 to vector<16x1xi32>
    %53 = arith.cmpi sge, %51, %52 : vector<16x1xi32>
    %c8_i32_17 = arith.constant 8 : i32
    %54 = vector.broadcast %c8_i32_17 : i32 to vector<16x1xi32>
    %55 = arith.cmpi slt, %51, %54 : vector<16x1xi32>
    %56 = arith.andi %53, %55 : vector<16x1xi1>
    %cst_18 = arith.constant 0.000000e+00 : f32
    %57 = vector.shape_cast %56 : vector<16x1xi1> to vector<16x1xi1>
    %58 = vector.broadcast %57 : vector<16x1xi1> to vector<16x128xi1>
    %59 = vector.broadcast %cst_18 : f32 to vector<16x128xf32>
    %60 = arith.select %58, %49, %59 : vector<16x128xi1>, vector<16x128xf32>
    %61 = arith.addf %45, %60 : vector<16x128xf32>
    %c0_19 = arith.constant 0 : index
    %c0_20 = arith.constant 0 : index
    %62 = vector.load %arg3[%c0_19, %c0_20] : memref<1x128xf32, #tpu.memory_space<vmem>>, vector<1x128xf32>
    %63 = vector.broadcast %62 : vector<1x128xf32> to vector<16x128xf32>
    %64 = arith.addf %61, %63 : vector<16x128xf32>
    %cst_21 = arith.constant 0.000000e+00 : f32
    %65 = vector.broadcast %cst_21 : f32 to vector<16x128xf32>
    %66 = arith.maximumf %64, %65 : vector<16x128xf32>
    %67 = vector.shape_cast %66 : vector<16x128xf32> to vector<2x8x128xf32>
    %cst_22 = arith.constant dense<0xFF800000> : vector<2x128xf32>
    %68 = vector.multi_reduction <maximumf>, %67, %cst_22 [1] : vector<2x8x128xf32> to vector<2x128xf32>
    %c0_23 = arith.constant 0 : index
    %c0_24 = arith.constant 0 : index
    %69 = vector.load %arg4[%c0_23, %c0_24] : memref<128x128xf32, #tpu.memory_space<vmem>>, vector<128x128xf32>
    %cst_25 = arith.constant dense<0.000000e+00> : vector<2x128xf32>
    %70 = tpu.matmul %68, %69, %cst_25 {dimension_numbers = #tpu.dot_dimension_numbers<[1], [0], [0], [1], [0, 0, 1, 1], [], []>} : vector<2x128xf32>, vector<128x128xf32>, vector<2x128xf32> -> vector<2x128xf32>
    %c0_26 = arith.constant 0 : index
    %c0_27 = arith.constant 0 : index
    %71 = vector.load %arg5[%c0_26, %c0_27] : memref<1x128xf32, #tpu.memory_space<vmem>>, vector<1x128xf32>
    %72 = vector.broadcast %71 : vector<1x128xf32> to vector<2x128xf32>
    %73 = arith.addf %70, %72 : vector<2x128xf32>
    %c0_28 = arith.constant 0 : index
    %c0_29 = arith.constant 0 : index
    %74 = vector.load %arg6[%c0_28, %c0_29] : memref<2x128xf32, #tpu.memory_space<vmem>>, vector<2x128xf32>
    tpu.vector_store %arg6[%c0_28, %c0_29], %73 {strides = array<i32>} : memref<2x128xf32, #tpu.memory_space<vmem>>, vector<2x128xf32>,
    return
  }
}

</mosaic_0001>

<llo_original>
// kernel: cnn_forward.1
$region0: #{cnn_forward.1}
  #allocation0 [shape = 'u32[]', space=smem, size = 0x4, offset = 0x4, fixed_abs, tag = 'smem constant byte address 0x4 - core index']
  #allocation1 [shape = 'u32[144,128]{1,0:T(1,128)}', space=vmem, size = 0x12000, scoped, tag = 'internal scratch']
  %s0 = inlined_call_operand.vmem [shape: s32[16,1], index: 0, kind: input, shape index: {}]
  %s1 = inlined_call_operand.hbm [shape: bf16[128,128], index: 1, kind: input, shape index: {}]
  %s2 = inlined_call_operand.hbm [shape: bf16[128,384], index: 2, kind: input, shape index: {}]
  %s3 = inlined_call_operand.vmem [shape: f32[1,128], index: 3, kind: input, shape index: {}]
  %s4 = inlined_call_operand.hbm [shape: f32[128,128], index: 4, kind: input, shape index: {}]
  %s5 = inlined_call_operand.vmem [shape: f32[1,128], index: 5, kind: input, shape index: {}]
  %s6 = inlined_call_operand.hbm [shape: f32[2,128], index: 6, kind: output, shape index: {}]
  %s7 = sld [smem:[#allocation0]]
  $region46: #{cnn_forward.1} parent=0
    _
  %s9 = ssub.s32 1, %s7
  %s10 = scalar_select 0, %s9, %s7
  $region1: #{cnn_forward.1} parent=0
    #allocation2 [shape = 'u8[32768]{0}', space=vmem, size = 0x8000, scoped, tag = 'input window, operand 1, single buffered']
    #allocation3 [shape = 's32[1]{0}', space=sflag, size = 0x4, scoped, tag = 'scoped memory for cnn_forward.1']
    #allocation4 [shape = 's32[1]{0}', space=sflag, size = 0x4, scoped, tag = 'scoped memory for cnn_forward.1']
    #allocation5 [shape = 'u8[98304]{0}', space=vmem, size = 0x18000, scoped, tag = 'input window, operand 2, single buffered']
    #allocation6 [shape = 's32[1]{0}', space=sflag, size = 0x4, scoped, tag = 'scoped memory for cnn_forward.1']
    #allocation7 [shape = 'u8[65536]{0}', space=vmem, size = 0x10000, scoped, tag = 'input window, operand 4, single buffered']
    #allocation8 [shape = 'u8[1024]{0}', space=vmem, size = 0x400, scoped, tag = 'output window, operand 0, single buffered']
    %11 = vsyncpa [#allocation3], 0
    %12 = vsyncpa [#allocation6], 0
    %13 = vsyncpa [#allocation4], 0
    // Predicated region
    $region2: #{cnn_forward.1} parent=1 // pred_check
      _
    $region3: #{cnn_forward.1} parent=1 // pred_check_branch
      %15 = sbr.rel (0) target = $region5
    $region4: #{cnn_forward.1} parent=1 // pred_region
      _
    $region5: #{cnn_forward.1} parent=1 // pred_fallthru
      _
    // Predicated region
    $region6: #{cnn_forward.1} parent=1 // pred_check
      _
    $region7: #{cnn_forward.1} parent=1 // pred_check_branch
      %17 = sbr.rel (0) target = $region9
    $region8: #{cnn_forward.1} parent=1 // pred_region
      %s19 = ssub.s32 1024, 1024
      %20 = vsyncadd [#allocation3], %s19
      %s21 = sshll.u32 [#allocation2], 4
      %s22 = int_to_ptr.vmem [resolvable:$true] %s21
      %27 = dma.hbm_to_vmem [thread:$0]  %s1, 1024, %s22, [#allocation3], 64, 64, 4
    $region9: #{cnn_forward.1} parent=1 // pred_fallthru
      _
    // Predicated region
    $region10: #{cnn_forward.1} parent=1 // pred_check
      _
    $region11: #{cnn_forward.1} parent=1 // pred_check_branch
      %29 = sbr.rel (0) target = $region13
    $region12: #{cnn_forward.1} parent=1 // pred_region
      %s31 = ssub.s32 3072, 3072
      %32 = vsyncadd [#allocation6], %s31
      %s33 = sshll.u32 [#allocation5], 4
      %s34 = int_to_ptr.vmem [resolvable:$true] %s33
      %39 = dma.hbm_to_vmem [thread:$0]  %s2, 3072, %s34, [#allocation6], 192, 192, 12
    $region13: #{cnn_forward.1} parent=1 // pred_fallthru
      _
    // Predicated region
    $region14: #{cnn_forward.1} parent=1 // pred_check
      _
    $region15: #{cnn_forward.1} parent=1 // pred_check_branch
      %41 = sbr.rel (0) target = $region17
    $region16: #{cnn_forward.1} parent=1 // pred_region
      _
    $region17: #{cnn_forward.1} parent=1 // pred_fallthru
      _
    // Predicated region
    $region18: #{cnn_forward.1} parent=1 // pred_check
      _
    $region19: #{cnn_forward.1} parent=1 // pred_check_branch
      %43 = sbr.rel (0) target = $region21
    $region20: #{cnn_forward.1} parent=1 // pred_region
      %s45 = ssub.s32 2048, 2048
      %46 = vsyncadd [#allocation6], %s45
      %s47 = sshll.u32 [#allocation7], 4
      %s48 = int_to_ptr.vmem [resolvable:$true] %s47
      %53 = dma.hbm_to_vmem [thread:$0]  %s4, 2048, %s48, [#allocation6], 128, 128, 8
    $region21: #{cnn_forward.1} parent=1 // pred_fallthru
      _
    // Predicated region
    $region22: #{cnn_forward.1} parent=1 // pred_check
      _
    $region23: #{cnn_forward.1} parent=1 // pred_check_branch
      %55 = sbr.rel (0) target = $region25
    $region24: #{cnn_forward.1} parent=1 // pred_region
      _
    $region25: #{cnn_forward.1} parent=1 // pred_fallthru
      _
    // Predicated region
    $region26: #{cnn_forward.1} parent=1 // pred_check
      _
    $region27: #{cnn_forward.1} parent=1 // pred_check_branch
      %57 = sbr.rel (0) target = $region29
    $region28: #{cnn_forward.1} parent=1 // pred_region
      %58 = dma.done [#allocation3], 1024
    $region29: #{cnn_forward.1} parent=1 // pred_fallthru
      _
    // Predicated region
    $region30: #{cnn_forward.1} parent=1 // pred_check
      _
    $region31: #{cnn_forward.1} parent=1 // pred_check_branch
      %60 = sbr.rel (0) target = $region33
    $region32: #{cnn_forward.1} parent=1 // pred_region
      %61 = dma.done [#allocation6], 3072
    $region33: #{cnn_forward.1} parent=1 // pred_fallthru
      _
    // Predicated region
    $region34: #{cnn_forward.1} parent=1 // pred_check
      _
    $region35: #{cnn_forward.1} parent=1 // pred_check_branch
      %63 = sbr.rel (0) target = $region37
    $region36: #{cnn_forward.1} parent=1 // pred_region
      %64 = dma.done [#allocation6], 2048
    $region37: #{cnn_forward.1} parent=1 // pred_fallthru
      _
    %v66 = vld [vmem:[%s0] sm:$0xff]
    %v67 = vld [vmem:[%s0 + $0x8] sm:$0xff]
    %v68 = vlaneseq
    %v69 = vand.u32 %v68, 127
    %70 = vset.pattern.permute.xlu0 0
    %71 = vperm.xlu0 %70, %v66
    %v72 = vpop.permute.xlu0 %71
    %73 = vset.pattern.permute.xlu0 0
    %74 = vperm.xlu0 %73, %v67
    %v75 = vpop.permute.xlu0 %74
    %vm76 = vcmp.eq.s32.totalorder %v69, %v72
    %vm77 = vcmp.eq.s32.totalorder %v69, %v75
    %v78 = vsel %vm76, 1.0, 0.0
    %v79 = vsel %vm77, 1.0, 0.0
    %v80 = vpack.c.bf16 %v79, %v78
    %v81 = vld [vmem:[#allocation2] sm:$0xf]
    %v82 = vld [vmem:[#allocation2 + $0x4] sm:$0xf]
    %v83 = vld [vmem:[#allocation2 + $0x8] sm:$0xf]
    %v84 = vld [vmem:[#allocation2 + $0xc] sm:$0xf]
    %v85 = vld [vmem:[#allocation2 + $0x10] sm:$0xf]
    %v86 = vld [vmem:[#allocation2 + $0x14] sm:$0xf]
    %v87 = vld [vmem:[#allocation2 + $0x18] sm:$0xf]
    %v88 = vld [vmem:[#allocation2 + $0x1c] sm:$0xf]
    %v89 = vld [vmem:[#allocation2 + $0x20] sm:$0xf]
    %v90 = vld [vmem:[#allocation2 + $0x24] sm:$0xf]
    %v91 = vld [vmem:[#allocation2 + $0x28] sm:$0xf]
    %v92 = vld [vmem:[#allocation2 + $0x2c] sm:$0xf]
    %v93 = vld [vmem:[#allocation2 + $0x30] sm:$0xf]
    %v94 = vld [vmem:[#allocation2 + $0x34] sm:$0xf]
    %v95 = vld [vmem:[#allocation2 + $0x38] sm:$0xf]
    %v96 = vld [vmem:[#allocation2 + $0x3c] sm:$0xf]
    %v113 = vunpack.c.l.b16 %v81
    %v114 = vunpack.c.l.b16 %v82
    %v115 = vunpack.c.l.b16 %v83
    %v116 = vunpack.c.l.b16 %v84
    %v117 = vunpack.c.l.b16 %v85
    %v118 = vunpack.c.l.b16 %v86
    %v119 = vunpack.c.l.b16 %v87
    %v120 = vunpack.c.l.b16 %v88
    %v121 = vunpack.c.l.b16 %v89
    %v122 = vunpack.c.l.b16 %v90
    %v123 = vunpack.c.l.b16 %v91
    %v124 = vunpack.c.l.b16 %v92
    %v125 = vunpack.c.l.b16 %v93
    %v126 = vunpack.c.l.b16 %v94
    %v127 = vunpack.c.l.b16 %v95
    %v128 = vunpack.c.l.b16 %v96
    %v129 = vpack.c.b16 %v114, %v113
    %v130 = vpack.c.b16 %v116, %v115
    %v131 = vpack.c.b16 %v118, %v117
    %v132 = vpack.c.b16 %v120, %v119
    %v133 = vpack.c.b16 %v122, %v121
    %v134 = vpack.c.b16 %v124, %v123
    %v135 = vpack.c.b16 %v126, %v125
    %v136 = vpack.c.b16 %v128, %v127
    %145 = vmatprep.subr.bf16.mxu0 0
    %146 = vmatpush1.bf16.msra.mxu0 %v136
    %147 = vmatprep.subr.bf16.mxu0 0
    %148 = vmatpush1.bf16.msra.mxu0 %v135
    %149 = vmatprep.subr.bf16.mxu0 0
    %150 = vmatpush1.bf16.msra.mxu0 %v134
    %151 = vmatprep.subr.bf16.mxu0 0
    %152 = vmatpush1.bf16.msra.mxu0 %v133
    %153 = vmatprep.subr.bf16.mxu0 0
    %154 = vmatpush1.bf16.msra.mxu0 %v132
    %155 = vmatprep.subr.bf16.mxu0 0
    %156 = vmatpush1.bf16.msra.mxu0 %v131
    %157 = vmatprep.subr.bf16.mxu0 0
    %158 = vmatpush1.bf16.msra.mxu0 %v130
    %159 = vmatprep.subr.bf16.mxu0 0
    %160 = vmatpush1.bf16.msra.mxu0 %v129
    %161 = vmatprep.subr.bf16.mxu0 0
    %162 = vmatpush2.bf16.msra.mxu0 0
    %163 = vmatprep.subr.bf16.mxu0 0
    %164 = vmatpush2.bf16.msra.mxu0 0
    %165 = vmatprep.subr.bf16.mxu0 0
    %166 = vmatpush2.bf16.msra.mxu0 0
    %167 = vmatprep.subr.bf16.mxu0 0
    %168 = vmatpush2.bf16.msra.mxu0 0
    %169 = vmatprep.subr.bf16.mxu0 0
    %170 = vmatpush2.bf16.msra.mxu0 0
    %171 = vmatprep.subr.bf16.mxu0 0
    %172 = vmatpush2.bf16.msra.mxu0 0
    %173 = vmatprep.subr.bf16.mxu0 0
    %174 = vmatpush2.bf16.msra.mxu0 0
    %175 = vmatprep.subr.bf16.mxu0 0
    %176 = vmatpush2.bf16.msra.mxu0 0
    %177 = vmatprep.mubr.bf16.mxu0 0
    %178 = vmatmul.mubr.bf16.gmra.mxu0 %v80
    %v179 = vpop.f32.mrf.mxu0
    %v180 = vadd.f32 0.0, %v179
    %v181 = vpop.f32.mrf.mxu0
    %v182 = vpop.f32.mrf.mxu0
    %v183 = vadd.f32 0.0, %v182
    %v184 = vpop.f32.mrf.mxu0
    %185 = vdwg.mxu0
    %v186 = vpack.c.bf16 %v183, %v180
    %v187 = vld [vmem:[#allocation5] sm:$0xff]
    %v188 = vld [vmem:[#allocation5 + $0x8] sm:$0xf]
    %v189 = vld [vmem:[#allocation5 + $0xc] sm:$0xff]
    %v190 = vld [vmem:[#allocation5 + $0x14] sm:$0xf]
    %v191 = vld [vmem:[#allocation5 + $0x18] sm:$0xff]
    %v192 = vld [vmem:[#allocation5 + $0x20] sm:$0xf]
    %v193 = vld [vmem:[#allocation5 + $0x24] sm:$0xff]
    %v194 = vld [vmem:[#allocation5 + $0x2c] sm:$0xf]
    %v195 = vld [vmem:[#allocation5 + $0x30] sm:$0xff]
    %v196 = vld [vmem:[#allocation5 + $0x38] sm:$0xf]
    %v197 = vld [vmem:[#allocation5 + $0x3c] sm:$0xff]
    %v198 = vld [vmem:[#allocation5 + $0x44] sm:$0xf]
    %v199 = vld [vmem:[#allocation5 + $0x48] sm:$0xff]
    %v200 = vld [vmem:[#allocation5 + $0x50] sm:$0xf]
    %v201 = vld [vmem:[#allocation5 + $0x54] sm:$0xff]
    %v202 = vld [vmem:[#allocation5 + $0x5c] sm:$0xf]
    %v203 = vld [vmem:[#allocation5 + $0x60] sm:$0xff]
    %v204 = vld [vmem:[#allocation5 + $0x68] sm:$0xf]
    %v205 = vld [vmem:[#allocation5 + $0x6c] sm:$0xff]
    %v206 = vld [vmem:[#allocation5 + $0x74] sm:$0xf]
    %v207 = vld [vmem:[#allocation5 + $0x78] sm:$0xff]
    %v208 = vld [vmem:[#allocation5 + $0x80] sm:$0xf]
    %v209 = vld [vmem:[#allocation5 + $0x84] sm:$0xff]
    %v210 = vld [vmem:[#allocation5 + $0x8c] sm:$0xf]
    %v211 = vld [vmem:[#allocation5 + $0x90] sm:$0xff]
    %v212 = vld [vmem:[#allocation5 + $0x98] sm:$0xf]
    %v213 = vld [vmem:[#allocation5 + $0x9c] sm:$0xff]
    %v214 = vld [vmem:[#allocation5 + $0xa4] sm:$0xf]
    %v215 = vld [vmem:[#allocation5 + $0xa8] sm:$0xff]
    %v216 = vld [vmem:[#allocation5 + $0xb0] sm:$0xf]
    %v217 = vld [vmem:[#allocation5 + $0xb4] sm:$0xff]
    %v218 = vld [vmem:[#allocation5 + $0xbc] sm:$0xf]
    %v251 = vunpack.c.l.b16 %v187
    %v252 = vunpack.c.h.b16 %v187
    %v253 = vunpack.c.l.b16 %v188
    %v254 = vunpack.c.l.b16 %v189
    %v255 = vunpack.c.h.b16 %v189
    %v256 = vunpack.c.l.b16 %v190
    %v257 = vunpack.c.l.b16 %v191
    %v258 = vunpack.c.h.b16 %v191
    %v259 = vunpack.c.l.b16 %v192
    %v260 = vunpack.c.l.b16 %v193
    %v261 = vunpack.c.h.b16 %v193
    %v262 = vunpack.c.l.b16 %v194
    %v263 = vunpack.c.l.b16 %v195
    %v264 = vunpack.c.h.b16 %v195
    %v265 = vunpack.c.l.b16 %v196
    %v266 = vunpack.c.l.b16 %v197
    %v267 = vunpack.c.h.b16 %v197
    %v268 = vunpack.c.l.b16 %v198
    %v269 = vunpack.c.l.b16 %v199
    %v270 = vunpack.c.h.b16 %v199
    %v271 = vunpack.c.l.b16 %v200
    %v272 = vunpack.c.l.b16 %v201
    %v273 = vunpack.c.h.b16 %v201
    %v274 = vunpack.c.l.b16 %v202
    %v275 = vunpack.c.l.b16 %v203
    %v276 = vunpack.c.h.b16 %v203
    %v277 = vunpack.c.l.b16 %v204
    %v278 = vunpack.c.l.b16 %v205
    %v279 = vunpack.c.h.b16 %v205
    %v280 = vunpack.c.l.b16 %v206
    %v281 = vunpack.c.l.b16 %v207
    %v282 = vunpack.c.h.b16 %v207
    %v283 = vunpack.c.l.b16 %v208
    %v284 = vunpack.c.l.b16 %v209
    %v285 = vunpack.c.h.b16 %v209
    %v286 = vunpack.c.l.b16 %v210
    %v287 = vunpack.c.l.b16 %v211
    %v288 = vunpack.c.h.b16 %v211
    %v289 = vunpack.c.l.b16 %v212
    %v290 = vunpack.c.l.b16 %v213
    %v291 = vunpack.c.h.b16 %v213
    %v292 = vunpack.c.l.b16 %v214
    %v293 = vunpack.c.l.b16 %v215
    %v294 = vunpack.c.h.b16 %v215
    %v295 = vunpack.c.l.b16 %v216
    %v296 = vunpack.c.l.b16 %v217
    %v297 = vunpack.c.h.b16 %v217
    %v298 = vunpack.c.l.b16 %v218
    %v299 = vpack.c.b16 %v254, %v251
    %v300 = vpack.c.b16 %v255, %v252
    %v301 = vpack.c.b16 %v256, %v253
    %v302 = vpack.c.b16 %v260, %v257
    %v303 = vpack.c.b16 %v261, %v258
    %v304 = vpack.c.b16 %v262, %v259
    %v305 = vpack.c.b16 %v266, %v263
    %v306 = vpack.c.b16 %v267, %v264
    %v307 = vpack.c.b16 %v268, %v265
    %v308 = vpack.c.b16 %v272, %v269
    %v309 = vpack.c.b16 %v273, %v270
    %v310 = vpack.c.b16 %v274, %v271
    %v311 = vpack.c.b16 %v278, %v275
    %v312 = vpack.c.b16 %v279, %v276
    %v313 = vpack.c.b16 %v280, %v277
    %v314 = vpack.c.b16 %v284, %v281
    %v315 = vpack.c.b16 %v285, %v282
    %v316 = vpack.c.b16 %v286, %v283
    %v317 = vpack.c.b16 %v290, %v287
    %v318 = vpack.c.b16 %v291, %v288
    %v319 = vpack.c.b16 %v292, %v289
    %v320 = vpack.c.b16 %v296, %v293
    %v321 = vpack.c.b16 %v297, %v294
    %v322 = vpack.c.b16 %v298, %v295
    %347 = vmatprep.subr.bf16.mxu0 %v321
    %348 = vmatpush1.bf16.msra.mxu0 %v320
    %349 = vmatprep.subr.bf16.mxu0 %v318
    %350 = vmatpush1.bf16.msra.mxu0 %v317
    %351 = vmatprep.subr.bf16.mxu0 %v315
    %352 = vmatpush1.bf16.msra.mxu0 %v314
    %353 = vmatprep.subr.bf16.mxu0 %v312
    %354 = vmatpush1.bf16.msra.mxu0 %v311
    %355 = vmatprep.subr.bf16.mxu0 %v309
    %356 = vmatpush1.bf16.msra.mxu0 %v308
    %357 = vmatprep.subr.bf16.mxu0 %v306
    %358 = vmatpush1.bf16.msra.mxu0 %v305
    %359 = vmatprep.subr.bf16.mxu0 %v303
    %360 = vmatpush1.bf16.msra.mxu0 %v302
    %361 = vmatprep.subr.bf16.mxu0 %v300
    %362 = vmatpush1.bf16.msra.mxu0 %v299
    %363 = vmatprep.subr.bf16.mxu0 0
    %364 = vmatpush2.bf16.msra.mxu0 0
    %365 = vmatprep.subr.bf16.mxu0 0
    %366 = vmatpush2.bf16.msra.mxu0 0
    %367 = vmatprep.subr.bf16.mxu0 0
    %368 = vmatpush2.bf16.msra.mxu0 0
    %369 = vmatprep.subr.bf16.mxu0 0
    %370 = vmatpush2.bf16.msra.mxu0 0
    %371 = vmatprep.subr.bf16.mxu0 0
    %372 = vmatpush2.bf16.msra.mxu0 0
    %373 = vmatprep.subr.bf16.mxu0 0
    %374 = vmatpush2.bf16.msra.mxu0 0
    %375 = vmatprep.subr.bf16.mxu0 0
    %376 = vmatpush2.bf16.msra.mxu0 0
    %377 = vmatprep.subr.bf16.mxu0 0
    %378 = vmatpush2.bf16.msra.mxu0 0
    %379 = vmatprep.mubr.bf16.mxu0 0
    %380 = vmatmul.mubr.bf16.gmra.mxu0 %v186
    %v381 = vpop.f32.mrf.mxu0
    %v382 = vadd.f32 0.0, %v381
    %v383 = vpop.f32.mrf.mxu0
    %v384 = vadd.f32 0.0, %v383
    %v385 = vpop.f32.mrf.mxu0
    %v386 = vadd.f32 0.0, %v385
    %v387 = vpop.f32.mrf.mxu0
    %v388 = vadd.f32 0.0, %v387
    %389 = vdwg.mxu0
    %390 = vmatprep.subr.bf16.mxu0 0
    %391 = vmatpush1.bf16.msra.mxu0 %v322
    %392 = vmatprep.subr.bf16.mxu0 0
    %393 = vmatpush1.bf16.msra.mxu0 %v319
    %394 = vmatprep.subr.bf16.mxu0 0
    %395 = vmatpush1.bf16.msra.mxu0 %v316
    %396 = vmatprep.subr.bf16.mxu0 0
    %397 = vmatpush1.bf16.msra.mxu0 %v313
    %398 = vmatprep.subr.bf16.mxu0 0
    %399 = vmatpush1.bf16.msra.mxu0 %v310
    %400 = vmatprep.subr.bf16.mxu0 0
    %401 = vmatpush1.bf16.msra.mxu0 %v307
    %402 = vmatprep.subr.bf16.mxu0 0
    %403 = vmatpush1.bf16.msra.mxu0 %v304
    %404 = vmatprep.subr.bf16.mxu0 0
    %405 = vmatpush1.bf16.msra.mxu0 %v301
    %406 = vmatprep.subr.bf16.mxu0 0
    %407 = vmatpush2.bf16.msra.mxu0 0
    %408 = vmatprep.subr.bf16.mxu0 0
    %409 = vmatpush2.bf16.msra.mxu0 0
    %410 = vmatprep.subr.bf16.mxu0 0
    %411 = vmatpush2.bf16.msra.mxu0 0
    %412 = vmatprep.subr.bf16.mxu0 0
    %413 = vmatpush2.bf16.msra.mxu0 0
    %414 = vmatprep.subr.bf16.mxu0 0
    %415 = vmatpush2.bf16.msra.mxu0 0
    %416 = vmatprep.subr.bf16.mxu0 0
    %417 = vmatpush2.bf16.msra.mxu0 0
    %418 = vmatprep.subr.bf16.mxu0 0
    %419 = vmatpush2.bf16.msra.mxu0 0
    %420 = vmatprep.subr.bf16.mxu0 0
    %421 = vmatpush2.bf16.msra.mxu0 0
    %422 = vmatprep.mubr.bf16.mxu0 0
    %423 = vmatmul.mubr.bf16.gmra.mxu0 %v186
    %v424 = vpop.f32.mrf.mxu0
    %v425 = vadd.f32 0.0, %v424
    %v426 = vpop.f32.mrf.mxu0
    %v427 = vpop.f32.mrf.mxu0
    %v428 = vadd.f32 0.0, %v427
    %v429 = vpop.f32.mrf.mxu0
    %430 = vdwg.mxu0
    %v431 = vlaneseq
    %v432 = vshrl.u32 %v431, 7
    %v433 = vadd.s32 %v432, 8
    %v434 = vand.u32 %v432, 7
    %v435 = vand.u32 %v433, 7
    %vm438 = vcmask 1040384
    %v439 = vrot.slane %v382, 7
    %v440 = vrot.slane %v386, 7
    %v441 = vsel %vm438, %v439, %v440
    %v444 = vsel %vm438, 0.0, %v439
    %v445 = vadd.s32 %v434, 4294967295
    %v446 = vadd.s32 %v435, 4294967295
    %vm447 = vcmp.ge.s32.totalorder %v445, 0
    %vm448 = vcmp.ge.s32.totalorder %v446, 0
    %vm449 = vcmp.lt.s32.totalorder %v445, 8
    %vm450 = vcmp.lt.s32.totalorder %v446, 8
    %vm451 = vmand %vm447, %vm449
    %vm452 = vmand %vm448, %vm450
    %v453 = vsel %vm451, 1, 0
    %v454 = vsel %vm452, 1, 0
    %vm455 = vcmp.eq.s32.totalorder %v453, 1
    %vm456 = vcmp.eq.s32.totalorder %v454, 1
    %v457 = vsel %vm455, %v444, 0.0
    %v458 = vsel %vm456, %v441, 0.0
    %v459 = vadd.f32 %v457, 0.0
    %v460 = vadd.f32 %v458, 0.0
    %vm461 = vcmp.ge.s32.totalorder %v434, 0
    %vm462 = vcmp.ge.s32.totalorder %v435, 0
    %vm463 = vcmp.lt.s32.totalorder %v434, 8
    %vm464 = vcmp.lt.s32.totalorder %v435, 8
    %vm465 = vmand %vm461, %vm463
    %vm466 = vmand %vm462, %vm464
    %v467 = vsel %vm465, 1, 0
    %v468 = vsel %vm466, 1, 0
    %vm469 = vcmp.eq.s32.totalorder %v467, 1
    %vm470 = vcmp.eq.s32.totalorder %v468, 1
    %v471 = vsel %vm469, %v384, 0.0
    %v472 = vsel %vm470, %v388, 0.0
    %v473 = vadd.f32 %v459, %v471
    %v474 = vadd.f32 %v460, %v472
    %vm477 = vcmask 1046528
    %v478 = vrot.slane %v425, 1
    %v479 = vrot.slane %v428, 1
    %v480 = vsel %vm477, %v478, %v479
    %v483 = vsel %vm477, %v479, 0.0
    %v484 = vadd.s32 %v434, 1
    %v485 = vadd.s32 %v435, 1
    %vm486 = vcmp.ge.s32.totalorder %v484, 0
    %vm487 = vcmp.ge.s32.totalorder %v485, 0
    %vm488 = vcmp.lt.s32.totalorder %v484, 8
    %vm489 = vcmp.lt.s32.totalorder %v485, 8
    %vm490 = vmand %vm486, %vm488
    %vm491 = vmand %vm487, %vm489
    %v492 = vsel %vm490, 1, 0
    %v493 = vsel %vm491, 1, 0
    %vm494 = vcmp.eq.s32.totalorder %v492, 1
    %vm495 = vcmp.eq.s32.totalorder %v493, 1
    %v496 = vsel %vm494, %v480, 0.0
    %v497 = vsel %vm495, %v483, 0.0
    %v498 = vadd.f32 %v473, %v496
    %v499 = vadd.f32 %v474, %v497
    %v500 = vld [vmem:[%s3] sm:$0x1]
    %v502 = vlaneseq
    %v503 = vshrl.u32 %v502, 7
    %v504 = vsub.s32 0, %v503
    %v505 = vrot.slane %v500, %v504
    %v507 = vadd.f32 %v498, %v505
    %v508 = vadd.f32 %v499, %v505
    %v509 = vmax.f32 %v507, 0.0
    %v510 = vmax.f32 %v508, 0.0
    %v511 = vrot.slane %v509, 4
    %v512 = vmax.f32 %v509, %v511
    %v513 = vrot.slane %v512, 2
    %v514 = vmax.f32 %v512, %v513
    %v515 = vrot.slane %v514, 1
    %v516 = vmax.f32 %v514, %v515
    %v517 = vrot.slane %v510, 4
    %v518 = vmax.f32 %v510, %v517
    %v519 = vrot.slane %v518, 2
    %v520 = vmax.f32 %v518, %v519
    %v521 = vrot.slane %v520, 1
    %v522 = vmax.f32 %v520, %v521
    %v523 = vld [vmem:[#allocation7] sm:$0xff]
    %v524 = vld [vmem:[#allocation7 + $0x8] sm:$0xff]
    %v525 = vld [vmem:[#allocation7 + $0x10] sm:$0xff]
    %v526 = vld [vmem:[#allocation7 + $0x18] sm:$0xff]
    %v527 = vld [vmem:[#allocation7 + $0x20] sm:$0xff]
    %v528 = vld [vmem:[#allocation7 + $0x28] sm:$0xff]
    %v529 = vld [vmem:[#allocation7 + $0x30] sm:$0xff]
    %v530 = vld [vmem:[#allocation7 + $0x38] sm:$0xff]
    %v531 = vld [vmem:[#allocation7 + $0x40] sm:$0xff]
    %v532 = vld [vmem:[#allocation7 + $0x48] sm:$0xff]
    %v533 = vld [vmem:[#allocation7 + $0x50] sm:$0xff]
    %v534 = vld [vmem:[#allocation7 + $0x58] sm:$0xff]
    %v535 = vld [vmem:[#allocation7 + $0x60] sm:$0xff]
    %v536 = vld [vmem:[#allocation7 + $0x68] sm:$0xff]
    %v537 = vld [vmem:[#allocation7 + $0x70] sm:$0xff]
    %v538 = vld [vmem:[#allocation7 + $0x78] sm:$0xff]
    %v539 = vld [vmem:[%s5] sm:$0x1]
    %v541 = vlaneseq
    %v542 = vshrl.u32 %v541, 7
    %v543 = vsub.s32 0, %v542
    %v544 = vrot.slane %v539, %v543
    %vm548 = vcmask 1041409
    %v549 = vsel %vm548, %v522, %v516
    %551 = vmatprep.subr.mxu0 0.0
    %552 = vmatpush1.msra.mxu0 %v538
    %553 = vmatprep.subr.mxu0 0.0
    %554 = vmatpush1.msra.mxu0 %v537
    %555 = vmatprep.subr.mxu0 0.0
    %556 = vmatpush1.msra.mxu0 %v536
    %557 = vmatprep.subr.mxu0 0.0
    %558 = vmatpush1.msra.mxu0 %v535
    %559 = vmatprep.subr.mxu0 0.0
    %560 = vmatpush1.msra.mxu0 %v534
    %561 = vmatprep.subr.mxu0 0.0
    %562 = vmatpush1.msra.mxu0 %v533
    %563 = vmatprep.subr.mxu0 0.0
    %564 = vmatpush1.msra.mxu0 %v532
    %565 = vmatprep.subr.mxu0 0.0
    %566 = vmatpush1.msra.mxu0 %v531
    %567 = vmatprep.subr.mxu0 0.0
    %568 = vmatpush1.msra.mxu0 %v530
    %569 = vmatprep.subr.mxu0 0.0
    %570 = vmatpush1.msra.mxu0 %v529
    %571 = vmatprep.subr.mxu0 0.0
    %572 = vmatpush1.msra.mxu0 %v528
    %573 = vmatprep.subr.mxu0 0.0
    %574 = vmatpush1.msra.mxu0 %v527
    %575 = vmatprep.subr.mxu0 0.0
    %576 = vmatpush1.msra.mxu0 %v526
    %577 = vmatprep.subr.mxu0 0.0
    %578 = vmatpush1.msra.mxu0 %v525
    %579 = vmatprep.subr.mxu0 0.0
    %580 = vmatpush1.msra.mxu0 %v524
    %581 = vmatprep.subr.mxu0 0.0
    %582 = vmatpush1.msra.mxu0 %v523
    %583 = vmatprep.subr.mxu0 0.0
    %584 = vmatpush2.msra.mxu0 0.0
    %585 = vmatprep.subr.mxu0 0.0
    %586 = vmatpush2.msra.mxu0 0.0
    %587 = vmatprep.subr.mxu0 0.0
    %588 = vmatpush2.msra.mxu0 0.0
    %589 = vmatprep.subr.mxu0 0.0
    %590 = vmatpush2.msra.mxu0 0.0
    %591 = vmatprep.subr.mxu0 0.0
    %592 = vmatpush2.msra.mxu0 0.0
    %593 = vmatprep.subr.mxu0 0.0
    %594 = vmatpush2.msra.mxu0 0.0
    %595 = vmatprep.subr.mxu0 0.0
    %596 = vmatpush2.msra.mxu0 0.0
    %597 = vmatprep.subr.mxu0 0.0
    %598 = vmatpush2.msra.mxu0 0.0
    %599 = vmatprep.subr.mxu0 0.0
    %600 = vmatpush2.msra.mxu0 0.0
    %601 = vmatprep.subr.mxu0 0.0
    %602 = vmatpush2.msra.mxu0 0.0
    %603 = vmatprep.subr.mxu0 0.0
    %604 = vmatpush2.msra.mxu0 0.0
    %605 = vmatprep.subr.mxu0 0.0
    %606 = vmatpush2.msra.mxu0 0.0
    %607 = vmatprep.subr.mxu0 0.0
    %608 = vmatpush2.msra.mxu0 0.0
    %609 = vmatprep.subr.mxu0 0.0
    %610 = vmatpush2.msra.mxu0 0.0
    %611 = vmatprep.subr.mxu0 0.0
    %612 = vmatpush2.msra.mxu0 0.0
    %613 = vmatprep.subr.mxu0 0.0
    %614 = vmatpush2.msra.mxu0 0.0
    %615 = vmatprep.mubr.f32.mxu0 0.0
    %616 = vmatmul.mubr.f32.gmra.mxu0 %v549
    %v617 = vpop.f32.mrf.mxu0
    %v618 = vadd.f32 %v544, %v617
    %v619 = vpop.f32.mrf.mxu0
    %620 = vdwg.mxu0
    %621 = vst [vmem:[#allocation8] sm:$0x3] %v618
    // Predicated region
    $region38: #{cnn_forward.1} parent=1 // pred_check
      _
    $region39: #{cnn_forward.1} parent=1 // pred_check_branch
      %623 = sbr.rel (0) target = $region41
    $region40: #{cnn_forward.1} parent=1 // pred_region
      %s625 = ssub.s32 32, 32
      %626 = vsyncadd [#allocation4], %s625
      %s628 = sshll.u32 [#allocation8], 4
      %s629 = int_to_ptr.vmem [resolvable:$true] %s628
      %631 = dma.vmem_to_hbm [thread:$0]  %s629, 32, %s6, [#allocation4]
    $region41: #{cnn_forward.1} parent=1 // pred_fallthru
      _
    // Predicated region
    $region42: #{cnn_forward.1} parent=1 // pred_check
      _
    $region43: #{cnn_forward.1} parent=1 // pred_check_branch
      %633 = sbr.rel (0) target = $region45
    $region44: #{cnn_forward.1} parent=1 // pred_region
      %634 = dma.done [#allocation4], 32
    $region45: #{cnn_forward.1} parent=1 // pred_fallthru
      _
    %635 = vsyncpa [#allocation3], 1
    %636 = vsyncpa [#allocation6], 1
    %637 = vsyncpa [#allocation4], 1

</llo_original>
